<compile_context>
chip_gen: v7x
topology: tpu7x:2x2x1
jax: 0.10.0
libtpu: 0.0.40
codegen_flags: <defaults>
</compile_context>

<pallas_src>
import jax
import jax.numpy as jnp
from jax.experimental import pallas as pl
from jax.experimental.pallas import tpu as pltpu


def _mish(x):
    # mish(x) = x * tanh(softplus(x)) = x * ((1+e^x)^2 - 1) / ((1+e^x)^2 + 1)
    # Clamp before exp: for x > 20 the ratio is exactly 1.0 in f32, and this
    # avoids inf intermediates. One EUP exp + one divide per element.
    t = jnp.exp(jnp.minimum(x, 20.0))
    u = (1.0 + t) * (1.0 + t)
    return x * ((u - 1.0) / (u + 1.0))


def mlp2_pooler_kernel(x_ref, w1_ref, b1_ref, w2_ref, b2_ref, mask_ref, o_ref):
    tb, s, d_in = x_ref.shape
    d_mid = w1_ref.shape[1]
    d_out = w2_ref.shape[1]

    # Fold the batch tile into the matmul M dimension (S is a sublane multiple
    # in the intended use, so this reshape is a free view).
    x = x_ref[...].reshape(tb * s, d_in)                      # bf16 (TB*S, D_in)

    # linear1 (bf16 x bf16 -> f32 accumulate) + mish
    h = jnp.dot(x, w1_ref[...], preferred_element_type=jnp.float32)
    h = h + b1_ref[...]                                        # (TB*S, D_mid)
    h = _mish(h)

    # dropout: multiply once by precomputed {0, 1/(1-p)} mask
    h = h * mask_ref[...].reshape(tb * s, d_mid)

    # linear2 + mish (final_activation=True)
    y = jnp.dot(h.astype(w2_ref.dtype), w2_ref[...],
                preferred_element_type=jnp.float32)
    y = y + b2_ref[...]                                        # (TB*S, D_out)
    y = _mish(y)

    # max-pool over the sequence axis -> dense (TB, D_out) store
    o_ref[...] = jnp.max(y.reshape(tb, s, d_out), axis=1).astype(o_ref.dtype)


def _choose_tb(B, S, D_in, D_mid, D_out, vmem_budget_bytes=40 * 1024 * 1024):
    """Largest batch tile that (a) divides B, (b) keeps block shapes legal
    (TB == B or TB % 8 == 0), and (c) fits a conservative VMEM estimate."""
    def est(tb):
        x_b = tb * S * D_in * 2            # bf16 input block
        m_b = tb * S * D_mid * 4           # f32 dropout mask block
        o_b = tb * D_out * 4               # f32 output block
        w_b = (D_in * D_mid + D_mid * D_out) * 2 + (D_mid + D_out) * 4
        interm = tb * S * (D_mid + D_out) * 4 * 2   # f32 intermediates
        return 2 * (x_b + m_b + o_b + w_b) + interm  # assume double buffering
    cands = [d for d in range(1, B + 1)
             if B % d == 0 and (d == B or d % 8 == 0)]
    best = 1
    for d in cands:
        if est(d) <= vmem_budget_bytes:
            best = max(best, d)
    return best


def mlp2_pooler(x, w1, b1, w2, b2, *, dropout_rng=None, p=0.5, training=True):
    """x: (B, S, D_in); w1: (D_in, D_mid); w2: (D_mid, D_out) -> (B, 1, D_out)."""
    B, S, D_in = x.shape
    D_mid = w1.shape[1]
    D_out = w2.shape[1]

    if dropout_rng is None:
        dropout_rng = jax.random.PRNGKey(0)
    if training and p > 0.0:
        keep = jax.random.bernoulli(dropout_rng, 1.0 - p, (B, S, D_mid))
        mask = keep.astype(jnp.float32) * (1.0 / (1.0 - p))
    else:
        mask = jnp.ones((B, S, D_mid), jnp.float32)

    TB = _choose_tb(B, S, D_in, D_mid, D_out)
    grid = (B // TB,)

    x_bf = x.astype(jnp.bfloat16)
    w1_bf = w1.astype(jnp.bfloat16)
    w2_bf = w2.astype(jnp.bfloat16)
    b1_2d = b1.astype(jnp.float32).reshape(1, D_mid)
    b2_2d = b2.astype(jnp.float32).reshape(1, D_out)

    out = pl.pallas_call(
        mlp2_pooler_kernel,
        out_shape=jax.ShapeDtypeStruct((B, D_out), jnp.float32),
        grid=grid,
        in_specs=[
            pl.BlockSpec((TB, S, D_in), lambda i: (i, 0, 0)),
            pl.BlockSpec((D_in, D_mid), lambda i: (0, 0)),
            pl.BlockSpec((1, D_mid), lambda i: (0, 0)),
            pl.BlockSpec((D_mid, D_out), lambda i: (0, 0)),
            pl.BlockSpec((1, D_out), lambda i: (0, 0)),
            pl.BlockSpec((TB, S, D_mid), lambda i: (i, 0, 0)),
        ],
        out_specs=pl.BlockSpec((TB, D_out), lambda i: (i, 0)),
        compiler_params=pltpu.CompilerParams(
            dimension_semantics=("parallel",),      # batch steps are independent
            vmem_limit_bytes=64 * 1024 * 1024,
        ),
    )(x_bf, w1_bf, b1_2d, w2_bf, b2_2d, mask)

    return out.reshape(B, 1, D_out)


def _reference(x, w1, b1, w2, b2, mask):
    """Pure-JAX reference with matching bf16 matmul precision."""
    h = jnp.dot(x.astype(jnp.bfloat16), w1.astype(jnp.bfloat16),
                preferred_element_type=jnp.float32) + b1
    h = h * jnp.tanh(jax.nn.softplus(h))
    h = h * mask
    y = jnp.dot(h.astype(jnp.bfloat16), w2.astype(jnp.bfloat16),
                preferred_element_type=jnp.float32) + b2
    y = y * jnp.tanh(jax.nn.softplus(y))
    return jnp.max(y, axis=1, keepdims=True)


if __name__ == "__main__":
    # Small shapes consistent with the module's forward:
    #   x: (B, S, D_in), linear1: D_in -> D_mid, linear2: D_mid -> D_out
    B, S, D_in, D_mid, D_out = 8, 8, 32, 128, 128

    key = jax.random.PRNGKey(0)
    kx, kw1, kb1, kw2, kb2, kdrop = jax.random.split(key, 6)

    x = jax.random.normal(kx, (B, S, D_in), dtype=jnp.float32)
    lim1 = 1.0 / float(jnp.sqrt(D_in))
    lim2 = 1.0 / float(jnp.sqrt(D_mid))
    w1 = jax.random.uniform(kw1, (D_in, D_mid), jnp.float32, -lim1, lim1)
    b1 = jax.random.uniform(kb1, (D_mid,), jnp.float32, -lim1, lim1)
    w2 = jax.random.uniform(kw2, (D_mid, D_out), jnp.float32, -lim2, lim2)
    b2 = jax.random.uniform(kb2, (D_out,), jnp.float32, -lim2, lim2)

    # Training-mode forward (dropout active), matching F.dropout defaults.
    out = mlp2_pooler(x, w1, b1, w2, b2, dropout_rng=kdrop, training=True)
    jax.block_until_ready(out)
    assert out.shape == (B, 1, D_out)

    # Sanity check against a pure-JAX reference with dropout disabled
    # (the in-kernel path is identical; only the mask differs per RNG).
    out_eval = mlp2_pooler(x, w1, b1, w2, b2, training=False)
    ref_eval = _reference(x, w1, b1, w2, b2,
                          jnp.ones((B, S, D_mid), jnp.float32))
    jax.block_until_ready(out_eval)
    assert jnp.allclose(out_eval, ref_eval, rtol=5e-2, atol=5e-2)

    print("KERNEL_OK")
</pallas_src>

<mosaic_0001>
module attributes {stable_mosaic.version = 11 : i64} {
  func.func @mlp2_pooler_kernel(%arg0: i32, %arg1: memref<8x8x32xbf16, #tpu.memory_space<vmem>>, %arg2: memref<32x128xbf16, #tpu.memory_space<vmem>>, %arg3: memref<1x128xf32, #tpu.memory_space<vmem>>, %arg4: memref<128x128xbf16, #tpu.memory_space<vmem>>, %arg5: memref<1x128xf32, #tpu.memory_space<vmem>>, %arg6: memref<8x8x128xf32, #tpu.memory_space<vmem>>, %arg7: memref<8x128xf32, #tpu.memory_space<vmem>>) attributes {dimension_semantics = [#tpu.dimension_semantics<parallel>], iteration_bounds = array<i64: 1>, scalar_prefetch = 0 : i64, scratch_operands = 0 : i64, tpu.core_type = #tpu.core_type<tc>, window_params = [{transform_indices = @transform_0, window_bounds = array<i64: 8, 8, 32>}, {pipeline_mode = #tpu.pipeline_mode<synchronous>, transform_indices = @transform_1, window_bounds = array<i64: 32, 128>}, {pipeline_mode = #tpu.pipeline_mode<synchronous>, transform_indices = @transform_2, window_bounds = array<i64: 1, 128>}, {pipeline_mode = #tpu.pipeline_mode<synchronous>, transform_indices = @transform_3, window_bounds = array<i64: 128, 128>}, {pipeline_mode = #tpu.pipeline_mode<synchronous>, transform_indices = @transform_4, window_bounds = array<i64: 1, 128>}, {transform_indices = @transform_5, window_bounds = array<i64: 8, 8, 128>}, {transform_indices = @transform_6, window_bounds = array<i64: 8, 128>}]} {
    %c0 = arith.constant 0 : index
    %c0_0 = arith.constant 0 : index
    %c0_1 = arith.constant 0 : index
    %0 = vector.load %arg1[%c0, %c0_0, %c0_1] : memref<8x8x32xbf16, #tpu.memory_space<vmem>>, vector<8x8x32xbf16>
    %1 = vector.shape_cast %0 : vector<8x8x32xbf16> to vector<64x32xbf16>
    %c0_2 = arith.constant 0 : index
    %c0_3 = arith.constant 0 : index
    %2 = vector.load %arg2[%c0_2, %c0_3] : memref<32x128xbf16, #tpu.memory_space<vmem>>, vector<32x128xbf16>
    %cst = arith.constant dense<0.000000e+00> : vector<64x128xf32>
    %3 = tpu.matmul %1, %2, %cst {dimension_numbers = #tpu.dot_dimension_numbers<[1], [0], [0], [1], [0, 0, 1, 1], [], []>} : vector<64x32xbf16>, vector<32x128xbf16>, vector<64x128xf32> -> vector<64x128xf32>
    %c0_4 = arith.constant 0 : index
    %c0_5 = arith.constant 0 : index
    %4 = vector.load %arg3[%c0_4, %c0_5] : memref<1x128xf32, #tpu.memory_space<vmem>>, vector<1x128xf32>
    %5 = vector.broadcast %4 : vector<1x128xf32> to vector<64x128xf32>
    %6 = arith.addf %3, %5 : vector<64x128xf32>
    %cst_6 = arith.constant 2.000000e+01 : f32
    %7 = vector.broadcast %cst_6 : f32 to vector<64x128xf32>
    %8 = arith.minimumf %6, %7 : vector<64x128xf32>
    %9 = math.exp %8 : vector<64x128xf32>
    %cst_7 = arith.constant 1.000000e+00 : f32
    %10 = vector.broadcast %cst_7 : f32 to vector<64x128xf32>
    %11 = arith.addf %10, %9 : vector<64x128xf32>
    %cst_8 = arith.constant 1.000000e+00 : f32
    %12 = vector.broadcast %cst_8 : f32 to vector<64x128xf32>
    %13 = arith.addf %12, %9 : vector<64x128xf32>
    %14 = arith.mulf %11, %13 : vector<64x128xf32>
    %cst_9 = arith.constant 1.000000e+00 : f32
    %15 = vector.broadcast %cst_9 : f32 to vector<64x128xf32>
    %16 = arith.subf %14, %15 : vector<64x128xf32>
    %cst_10 = arith.constant 1.000000e+00 : f32
    %17 = vector.broadcast %cst_10 : f32 to vector<64x128xf32>
    %18 = arith.addf %14, %17 : vector<64x128xf32>
    %19 = arith.divf %16, %18 : vector<64x128xf32>
    %20 = arith.mulf %6, %19 : vector<64x128xf32>
    %c0_11 = arith.constant 0 : index
    %c0_12 = arith.constant 0 : index
    %c0_13 = arith.constant 0 : index
    %21 = vector.load %arg6[%c0_11, %c0_12, %c0_13] : memref<8x8x128xf32, #tpu.memory_space<vmem>>, vector<8x8x128xf32>
    %22 = vector.shape_cast %21 : vector<8x8x128xf32> to vector<64x128xf32>
    %23 = arith.mulf %20, %22 : vector<64x128xf32>
    %24 = arith.truncf %23 : vector<64x128xf32> to vector<64x128xbf16>
    %c0_14 = arith.constant 0 : index
    %c0_15 = arith.constant 0 : index
    %25 = vector.load %arg4[%c0_14, %c0_15] : memref<128x128xbf16, #tpu.memory_space<vmem>>, vector<128x128xbf16>
    %cst_16 = arith.constant dense<0.000000e+00> : vector<64x128xf32>
    %26 = tpu.matmul %24, %25, %cst_16 {dimension_numbers = #tpu.dot_dimension_numbers<[1], [0], [0], [1], [0, 0, 1, 1], [], []>} : vector<64x128xbf16>, vector<128x128xbf16>, vector<64x128xf32> -> vector<64x128xf32>
    %c0_17 = arith.constant 0 : index
    %c0_18 = arith.constant 0 : index
    %27 = vector.load %arg5[%c0_17, %c0_18] : memref<1x128xf32, #tpu.memory_space<vmem>>, vector<1x128xf32>
    %28 = vector.broadcast %27 : vector<1x128xf32> to vector<64x128xf32>
    %29 = arith.addf %26, %28 : vector<64x128xf32>
    %cst_19 = arith.constant 2.000000e+01 : f32
    %30 = vector.broadcast %cst_19 : f32 to vector<64x128xf32>
    %31 = arith.minimumf %29, %30 : vector<64x128xf32>
    %32 = math.exp %31 : vector<64x128xf32>
    %cst_20 = arith.constant 1.000000e+00 : f32
    %33 = vector.broadcast %cst_20 : f32 to vector<64x128xf32>
    %34 = arith.addf %33, %32 : vector<64x128xf32>
    %cst_21 = arith.constant 1.000000e+00 : f32
    %35 = vector.broadcast %cst_21 : f32 to vector<64x128xf32>
    %36 = arith.addf %35, %32 : vector<64x128xf32>
    %37 = arith.mulf %34, %36 : vector<64x128xf32>
    %cst_22 = arith.constant 1.000000e+00 : f32
    %38 = vector.broadcast %cst_22 : f32 to vector<64x128xf32>
    %39 = arith.subf %37, %38 : vector<64x128xf32>
    %cst_23 = arith.constant 1.000000e+00 : f32
    %40 = vector.broadcast %cst_23 : f32 to vector<64x128xf32>
    %41 = arith.addf %37, %40 : vector<64x128xf32>
    %42 = arith.divf %39, %41 : vector<64x128xf32>
    %43 = arith.mulf %29, %42 : vector<64x128xf32>
    %44 = vector.shape_cast %43 : vector<64x128xf32> to vector<8x8x128xf32>
    %cst_24 = arith.constant dense<0xFF800000> : vector<8x128xf32>
    %45 = vector.multi_reduction <maximumf>, %44, %cst_24 [1] : vector<8x8x128xf32> to vector<8x128xf32>
    %c0_25 = arith.constant 0 : index
    %c0_26 = arith.constant 0 : index
    %46 = vector.load %arg7[%c0_25, %c0_26] : memref<8x128xf32, #tpu.memory_space<vmem>>, vector<8x128xf32>
    tpu.vector_store %arg7[%c0_25, %c0_26], %45 {strides = array<i32>} : memref<8x128xf32, #tpu.memory_space<vmem>>, vector<8x128xf32>,
    return
  }
  func.func @transform_0(%arg0: i32) -> (i32, i32, i32) {
    %c0_i32 = arith.constant 0 : i32
    %c0_i32_0 = arith.constant 0 : i32
    %c0_i32_1 = arith.constant 0 : i32
    return %arg0, %c0_i32, %c0_i32_0 : i32, i32, i32
  }
  func.func @transform_1(%arg0: i32) -> (i32, i32) {
    %c0_i32 = arith.constant 0 : i32
    %c0_i32_0 = arith.constant 0 : i32
    %c0_i32_1 = arith.constant 0 : i32
    return %c0_i32, %c0_i32_0 : i32, i32
  }
  func.func @transform_2(%arg0: i32) -> (i32, i32) {
    %c0_i32 = arith.constant 0 : i32
    %c0_i32_0 = arith.constant 0 : i32
    %c0_i32_1 = arith.constant 0 : i32
    return %c0_i32, %c0_i32_0 : i32, i32
  }
  func.func @transform_3(%arg0: i32) -> (i32, i32) {
    %c0_i32 = arith.constant 0 : i32
    %c0_i32_0 = arith.constant 0 : i32
    %c0_i32_1 = arith.constant 0 : i32
    return %c0_i32, %c0_i32_0 : i32, i32
  }
  func.func @transform_4(%arg0: i32) -> (i32, i32) {
    %c0_i32 = arith.constant 0 : i32
    %c0_i32_0 = arith.constant 0 : i32
    %c0_i32_1 = arith.constant 0 : i32
    return %c0_i32, %c0_i32_0 : i32, i32
  }
  func.func @transform_5(%arg0: i32) -> (i32, i32, i32) {
    %c0_i32 = arith.constant 0 : i32
    %c0_i32_0 = arith.constant 0 : i32
    %c0_i32_1 = arith.constant 0 : i32
    return %arg0, %c0_i32, %c0_i32_0 : i32, i32, i32
  }
  func.func @transform_6(%arg0: i32) -> (i32, i32) {
    %c0_i32 = arith.constant 0 : i32
    %c0_i32_0 = arith.constant 0 : i32
    return %arg0, %c0_i32 : i32, i32
  }
}

</mosaic_0001>

<llo_original>
// kernel: tpu_custom_call.1
$region0: #{tpu_custom_call.1}
  #allocation0 [shape = 'u32[]', space=smem, size = 0x4, offset = 0x4, fixed_abs, tag = 'smem constant byte address 0x4 - core index']
  #allocation1 [shape = 'u32[144,128]{1,0:T(1,128)}', space=vmem, size = 0x12000, scoped, tag = 'internal scratch']
  %s0 = inlined_call_operand.hbm [shape: bf16[8,8,32], index: 0, kind: input, shape index: {}]
  %s1 = inlined_call_operand.hbm [shape: bf16[32,128], index: 1, kind: input, shape index: {}]
  %s2 = inlined_call_operand.hbm [shape: f32[1,128], index: 2, kind: input, shape index: {}]
  %s3 = inlined_call_operand.hbm [shape: bf16[128,128], index: 3, kind: input, shape index: {}]
  %s4 = inlined_call_operand.hbm [shape: f32[1,128], index: 4, kind: input, shape index: {}]
  %s5 = inlined_call_operand.hbm [shape: f32[8,8,128], index: 5, kind: input, shape index: {}]
  %s6 = inlined_call_operand.hbm [shape: f32[8,128], index: 6, kind: output, shape index: {}]
  %s7 = sld [smem:[#allocation0]]
  $region58: #{tpu_custom_call.1} parent=0
    _
  %s9 = ssub.s32 1, %s7
  %s10 = scalar_select 0, %s9, %s7
  $region1: #{tpu_custom_call.1} parent=0
    #allocation2 [shape = 'u8[16384]{0}', space=vmem, size = 0x4000, scoped, tag = 'input window, operand 0, single buffered']
    #allocation3 [shape = 's32[1]{0}', space=sflag, size = 0x4, scoped, tag = 'scoped memory for tpu_custom_call.1']
    #allocation4 [shape = 's32[1]{0}', space=sflag, size = 0x4, scoped, tag = 'scoped memory for tpu_custom_call.1']
    #allocation5 [shape = 'u8[8192]{0}', space=vmem, size = 0x2000, scoped, tag = 'input window, operand 1, single buffered']
    #allocation6 [shape = 's32[1]{0}', space=sflag, size = 0x4, scoped, tag = 'scoped memory for tpu_custom_call.1']
    #allocation7 [shape = 'u8[512]{0}', space=vmem, size = 0x400, scoped, tag = 'input window, operand 2, single buffered']
    #allocation8 [shape = 'u8[32768]{0}', space=vmem, size = 0x8000, scoped, tag = 'input window, operand 3, single buffered']
    #allocation9 [shape = 's32[1]{0}', space=sflag, size = 0x4, scoped, tag = 'scoped memory for tpu_custom_call.1']
    #allocation10 [shape = 'u8[512]{0}', space=vmem, size = 0x400, scoped, tag = 'input window, operand 4, single buffered']
    #allocation11 [shape = 'u8[32768]{0}', space=vmem, size = 0x8000, scoped, tag = 'input window, operand 5, single buffered']
    #allocation12 [shape = 's32[1]{0}', space=sflag, size = 0x4, scoped, tag = 'scoped memory for tpu_custom_call.1']
    #allocation13 [shape = 'u8[4096]{0}', space=vmem, size = 0x1000, scoped, tag = 'output window, operand 0, single buffered']
    %11 = vsyncpa [#allocation3], 0
    %12 = vsyncpa [#allocation6], 0
    %13 = vsyncpa [#allocation9], 0
    %14 = vsyncpa [#allocation12], 0
    %15 = vsyncpa [#allocation4], 0
    // Predicated region
    $region2: #{tpu_custom_call.1} parent=1 // pred_check
      _
    $region3: #{tpu_custom_call.1} parent=1 // pred_check_branch
      %17 = sbr.rel (0) target = $region5
    $region4: #{tpu_custom_call.1} parent=1 // pred_region
      %s19 = ssub.s32 512, 512
      %20 = vsyncadd [#allocation3], %s19
      %s21 = sshll.u32 [#allocation2], 4
      %s22 = int_to_ptr.vmem [resolvable:$true] %s21
      %27 = dma.hbm_to_vmem [thread:$0]  %s0, 512, %s22, [#allocation3], 64, 64, 4
    $region5: #{tpu_custom_call.1} parent=1 // pred_fallthru
      _
    // Predicated region
    $region6: #{tpu_custom_call.1} parent=1 // pred_check
      _
    $region7: #{tpu_custom_call.1} parent=1 // pred_check_branch
      %29 = sbr.rel (0) target = $region9
    $region8: #{tpu_custom_call.1} parent=1 // pred_region
      %s31 = ssub.s32 256, 256
      %32 = vsyncadd [#allocation6], %s31
      %s33 = sshll.u32 [#allocation5], 4
      %s34 = int_to_ptr.vmem [resolvable:$true] %s33
      %39 = dma.hbm_to_vmem [thread:$0]  %s1, 256, %s34, [#allocation6], 64, 64, 4
    $region9: #{tpu_custom_call.1} parent=1 // pred_fallthru
      _
    // Predicated region
    $region10: #{tpu_custom_call.1} parent=1 // pred_check
      _
    $region11: #{tpu_custom_call.1} parent=1 // pred_check_branch
      %41 = sbr.rel (0) target = $region13
    $region12: #{tpu_custom_call.1} parent=1 // pred_region
      %s43 = ssub.s32 16, 16
      %44 = vsyncadd [#allocation6], %s43
      %s46 = sshll.u32 [#allocation7], 4
      %s47 = int_to_ptr.vmem [resolvable:$true] %s46
      %49 = dma.hbm_to_vmem [thread:$0]  %s2, 16, %s47, [#allocation6]
    $region13: #{tpu_custom_call.1} parent=1 // pred_fallthru
      _
    // Predicated region
    $region14: #{tpu_custom_call.1} parent=1 // pred_check
      _
    $region15: #{tpu_custom_call.1} parent=1 // pred_check_branch
      %51 = sbr.rel (0) target = $region17
    $region16: #{tpu_custom_call.1} parent=1 // pred_region
      %s53 = ssub.s32 1024, 1024
      %54 = vsyncadd [#allocation9], %s53
      %s55 = sshll.u32 [#allocation8], 4
      %s56 = int_to_ptr.vmem [resolvable:$true] %s55
      %61 = dma.hbm_to_vmem [thread:$0]  %s3, 1024, %s56, [#allocation9], 64, 64, 4
    $region17: #{tpu_custom_call.1} parent=1 // pred_fallthru
      _
    // Predicated region
    $region18: #{tpu_custom_call.1} parent=1 // pred_check
      _
    $region19: #{tpu_custom_call.1} parent=1 // pred_check_branch
      %63 = sbr.rel (0) target = $region21
    $region20: #{tpu_custom_call.1} parent=1 // pred_region
      %s65 = ssub.s32 16, 16
      %66 = vsyncadd [#allocation9], %s65
      %s68 = sshll.u32 [#allocation10], 4
      %s69 = int_to_ptr.vmem [resolvable:$true] %s68
      %71 = dma.hbm_to_vmem [thread:$0]  %s4, 16, %s69, [#allocation9]
    $region21: #{tpu_custom_call.1} parent=1 // pred_fallthru
      _
    // Predicated region
    $region22: #{tpu_custom_call.1} parent=1 // pred_check
      _
    $region23: #{tpu_custom_call.1} parent=1 // pred_check_branch
      %73 = sbr.rel (0) target = $region25
    $region24: #{tpu_custom_call.1} parent=1 // pred_region
      %s75 = ssub.s32 1024, 1024
      %76 = vsyncadd [#allocation12], %s75
      %s77 = sshll.u32 [#allocation11], 4
      %s78 = int_to_ptr.vmem [resolvable:$true] %s77
      %83 = dma.hbm_to_vmem [thread:$0]  %s5, 1024, %s78, [#allocation12], 128, 128, 8
    $region25: #{tpu_custom_call.1} parent=1 // pred_fallthru
      _
    // Predicated region
    $region26: #{tpu_custom_call.1} parent=1 // pred_check
      _
    $region27: #{tpu_custom_call.1} parent=1 // pred_check_branch
      %85 = sbr.rel (0) target = $region29
    $region28: #{tpu_custom_call.1} parent=1 // pred_region
      %86 = dma.done [#allocation3], 512
    $region29: #{tpu_custom_call.1} parent=1 // pred_fallthru
      _
    // Predicated region
    $region30: #{tpu_custom_call.1} parent=1 // pred_check
      _
    $region31: #{tpu_custom_call.1} parent=1 // pred_check_branch
      %88 = sbr.rel (0) target = $region33
    $region32: #{tpu_custom_call.1} parent=1 // pred_region
      %89 = dma.done [#allocation6], 256
    $region33: #{tpu_custom_call.1} parent=1 // pred_fallthru
      _
    // Predicated region
    $region34: #{tpu_custom_call.1} parent=1 // pred_check
      _
    $region35: #{tpu_custom_call.1} parent=1 // pred_check_branch
      %91 = sbr.rel (0) target = $region37
    $region36: #{tpu_custom_call.1} parent=1 // pred_region
      %92 = dma.done [#allocation6], 16
    $region37: #{tpu_custom_call.1} parent=1 // pred_fallthru
      _
    // Predicated region
    $region38: #{tpu_custom_call.1} parent=1 // pred_check
      _
    $region39: #{tpu_custom_call.1} parent=1 // pred_check_branch
      %94 = sbr.rel (0) target = $region41
    $region40: #{tpu_custom_call.1} parent=1 // pred_region
      %95 = dma.done [#allocation9], 1024
    $region41: #{tpu_custom_call.1} parent=1 // pred_fallthru
      _
    // Predicated region
    $region42: #{tpu_custom_call.1} parent=1 // pred_check
      _
    $region43: #{tpu_custom_call.1} parent=1 // pred_check_branch
      %97 = sbr.rel (0) target = $region45
    $region44: #{tpu_custom_call.1} parent=1 // pred_region
      %98 = dma.done [#allocation9], 16
    $region45: #{tpu_custom_call.1} parent=1 // pred_fallthru
      _
    // Predicated region
    $region46: #{tpu_custom_call.1} parent=1 // pred_check
      _
    $region47: #{tpu_custom_call.1} parent=1 // pred_check_branch
      %100 = sbr.rel (0) target = $region49
    $region48: #{tpu_custom_call.1} parent=1 // pred_region
      %101 = dma.done [#allocation12], 1024
    $region49: #{tpu_custom_call.1} parent=1 // pred_fallthru
      _
    %v103 = vld [vmem:[#allocation2] sm:$0xf]
    %v104 = vld [vmem:[#allocation2 + $0x4] sm:$0xf]
    %v105 = vld [vmem:[#allocation2 + $0x8] sm:$0xf]
    %v106 = vld [vmem:[#allocation2 + $0xc] sm:$0xf]
    %v107 = vld [vmem:[#allocation2 + $0x10] sm:$0xf]
    %v108 = vld [vmem:[#allocation2 + $0x14] sm:$0xf]
    %v109 = vld [vmem:[#allocation2 + $0x18] sm:$0xf]
    %v110 = vld [vmem:[#allocation2 + $0x1c] sm:$0xf]
    %v111 = vld [vmem:[#allocation5] sm:$0xf]
    %v112 = vld [vmem:[#allocation5 + $0x4] sm:$0xf]
    %v113 = vld [vmem:[#allocation5 + $0x8] sm:$0xf]
    %v114 = vld [vmem:[#allocation5 + $0xc] sm:$0xf]
    %v115 = vld [vmem:[#allocation7] sm:$0x1]
    %v117 = vlaneseq
    %v118 = vshrl.u32 %v117, 7
    %v119 = vsub.s32 0, %v118
    %v120 = vrot.slane %v115, %v119
    %v130 = vunpack.c.l.b16 %v103
    %v131 = vunpack.c.l.b16 %v104
    %v132 = vunpack.c.l.b16 %v105
    %v133 = vunpack.c.l.b16 %v106
    %v134 = vunpack.c.l.b16 %v107
    %v135 = vunpack.c.l.b16 %v108
    %v136 = vunpack.c.l.b16 %v109
    %v137 = vunpack.c.l.b16 %v110
    %v138 = vpack.c.b16 %v131, %v130
    %v139 = vpack.c.b16 %v133, %v132
    %v140 = vpack.c.b16 %v135, %v134
    %v141 = vpack.c.b16 %v137, %v136
    %v146 = vunpack.c.l.b16 %v111
    %v147 = vunpack.c.l.b16 %v112
    %v148 = vunpack.c.l.b16 %v113
    %v149 = vunpack.c.l.b16 %v114
    %v150 = vpack.c.b16 %v147, %v146
    %v151 = vpack.c.b16 %v149, %v148
    %vm154 = vcmask 261120
    %v156 = vsel %vm154, %v138, 0
    %v159 = vsel %vm154, %v139, 0
    %v162 = vsel %vm154, %v140, 0
    %v165 = vsel %vm154, %v141, 0
    %167 = vmatprep.subr.bf16.mxu0 0
    %168 = vmatpush1.bf16.msra.mxu0 %v150
    %169 = vmatprep.subr.bf16.mxu0 0
    %170 = vmatpush1.bf16.msra.mxu0 %v151
    %171 = vmatprep.subr.bf16.mxu0 0
    %172 = vmatpush1.bf16.msra.mxu0 0
    %173 = vmatprep.subr.bf16.mxu0 0
    %174 = vmatpush1.bf16.msra.mxu0 0
    %175 = vmatprep.subr.bf16.mxu0 0
    %176 = vmatpush1.bf16.msra.mxu0 0
    %177 = vmatprep.subr.bf16.mxu0 0
    %178 = vmatpush1.bf16.msra.mxu0 0
    %179 = vmatprep.subr.bf16.mxu0 0
    %180 = vmatpush1.bf16.msra.mxu0 0
    %181 = vmatprep.subr.bf16.mxu0 0
    %182 = vmatpush1.bf16.msra.mxu0 0
    %183 = vmatprep.subr.bf16.mxu0 0
    %184 = vmatpush1.bf16.msra.mxu0 0
    %185 = vmatprep.subr.bf16.mxu0 0
    %186 = vmatpush1.bf16.msra.mxu0 0
    %187 = vmatprep.subr.bf16.mxu0 0
    %188 = vmatpush1.bf16.msra.mxu0 0
    %189 = vmatprep.subr.bf16.mxu0 0
    %190 = vmatpush1.bf16.msra.mxu0 0
    %191 = vmatprep.subr.bf16.mxu0 0
    %192 = vmatpush1.bf16.msra.mxu0 0
    %193 = vmatprep.subr.bf16.mxu0 0
    %194 = vmatpush1.bf16.msra.mxu0 0
    %195 = vmatprep.subr.bf16.mxu0 0
    %196 = vmatpush1.bf16.msra.mxu0 0
    %197 = vmatprep.subr.bf16.mxu0 0
    %198 = vmatpush1.bf16.msra.mxu0 0
    %199 = vmatprep.mubr.bf16.mxu0 0
    %200 = vmatmul.mubr.bf16.gmra.mrb[0].mxu0 %v156
    %v201 = vpop.f32.mrb[0].mxu0
    %v202 = vadd.f32 %v120, %v201
    %v203 = vpop.f32.mrb[0].mxu0
    %v204 = vpop.f32.mrb[0].mxu0
    %v205 = vadd.f32 %v120, %v204
    %v206 = vpop.f32.mrb[0].mxu0
    %207 = vmatprep.mubr.bf16.mxu0 0
    %208 = vmatmul.mubr.bf16.gmra.mrb[0].mxu0 %v159
    %v209 = vpop.f32.mrb[0].mxu0
    %v210 = vadd.f32 %v120, %v209
    %v211 = vpop.f32.mrb[0].mxu0
    %v212 = vpop.f32.mrb[0].mxu0
    %v213 = vadd.f32 %v120, %v212
    %v214 = vpop.f32.mrb[0].mxu0
    %215 = vmatprep.mubr.bf16.mxu0 0
    %216 = vmatmul.mubr.bf16.gmra.mrb[0].mxu0 %v162
    %v217 = vpop.f32.mrb[0].mxu0
    %v218 = vadd.f32 %v120, %v217
    %v219 = vpop.f32.mrb[0].mxu0
    %v220 = vpop.f32.mrb[0].mxu0
    %v221 = vadd.f32 %v120, %v220
    %v222 = vpop.f32.mrb[0].mxu0
    %223 = vmatprep.mubr.bf16.mxu0 0
    %224 = vmatmul.mubr.bf16.gmra.mrb[0].mxu0 %v165
    %v225 = vpop.f32.mrb[0].mxu0
    %v226 = vadd.f32 %v120, %v225
    %v227 = vpop.f32.mrb[0].mxu0
    %v228 = vpop.f32.mrb[0].mxu0
    %v229 = vadd.f32 %v120, %v228
    %v230 = vpop.f32.mrb[0].mxu0
    %231 = vdwg.mxu0
    %v232 = vmin.f32 %v202, 20.0
    %v233 = vmin.f32 %v205, 20.0
    %v234 = vmin.f32 %v210, 20.0
    %v235 = vmin.f32 %v213, 20.0
    %v236 = vmin.f32 %v218, 20.0
    %v237 = vmin.f32 %v221, 20.0
    %v238 = vmin.f32 %v226, 20.0
    %v239 = vmin.f32 %v229, 20.0
    %v240 = vmul.f32 %v232, 1.442695
    %v241 = vpow.pop %v240
    %v242 = vmul.f32 %v233, 1.442695
    %v243 = vpow.pop %v242
    %v244 = vmul.f32 %v234, 1.442695
    %v245 = vpow.pop %v244
    %v246 = vmul.f32 %v235, 1.442695
    %v247 = vpow.pop %v246
    %v248 = vmul.f32 %v236, 1.442695
    %v249 = vpow.pop %v248
    %v250 = vmul.f32 %v237, 1.442695
    %v251 = vpow.pop %v250
    %v252 = vmul.f32 %v238, 1.442695
    %v253 = vpow.pop %v252
    %v254 = vmul.f32 %v239, 1.442695
    %v255 = vpow.pop %v254
    %v256 = vadd.f32 %v241, 1.0
    %v257 = vadd.f32 %v243, 1.0
    %v258 = vadd.f32 %v245, 1.0
    %v259 = vadd.f32 %v247, 1.0
    %v260 = vadd.f32 %v249, 1.0
    %v261 = vadd.f32 %v251, 1.0
    %v262 = vadd.f32 %v253, 1.0
    %v263 = vadd.f32 %v255, 1.0
    %v264 = vmul.f32 %v256, %v256
    %v265 = vmul.f32 %v257, %v257
    %v266 = vmul.f32 %v258, %v258
    %v267 = vmul.f32 %v259, %v259
    %v268 = vmul.f32 %v260, %v260
    %v269 = vmul.f32 %v261, %v261
    %v270 = vmul.f32 %v262, %v262
    %v271 = vmul.f32 %v263, %v263
    %v272 = vsub.f32 %v264, 1.0
    %v273 = vsub.f32 %v265, 1.0
    %v274 = vsub.f32 %v266, 1.0
    %v275 = vsub.f32 %v267, 1.0
    %v276 = vsub.f32 %v268, 1.0
    %v277 = vsub.f32 %v269, 1.0
    %v278 = vsub.f32 %v270, 1.0
    %v279 = vsub.f32 %v271, 1.0
    %v280 = vadd.f32 %v264, 1.0
    %v281 = vadd.f32 %v265, 1.0
    %v282 = vadd.f32 %v266, 1.0
    %v283 = vadd.f32 %v267, 1.0
    %v284 = vadd.f32 %v268, 1.0
    %v285 = vadd.f32 %v269, 1.0
    %v286 = vadd.f32 %v270, 1.0
    %v287 = vadd.f32 %v271, 1.0
    %v288 = vrcp.pop %v280
    %v289 = vmul.f32 %v272, %v288
    %v290 = vrcp.pop %v281
    %v291 = vmul.f32 %v273, %v290
    %v292 = vrcp.pop %v282
    %v293 = vmul.f32 %v274, %v292
    %v294 = vrcp.pop %v283
    %v295 = vmul.f32 %v275, %v294
    %v296 = vrcp.pop %v284
    %v297 = vmul.f32 %v276, %v296
    %v298 = vrcp.pop %v285
    %v299 = vmul.f32 %v277, %v298
    %v300 = vrcp.pop %v286
    %v301 = vmul.f32 %v278, %v300
    %v302 = vrcp.pop %v287
    %v303 = vmul.f32 %v279, %v302
    %v304 = vmul.f32 %v202, %v289
    %v305 = vmul.f32 %v205, %v291
    %v306 = vmul.f32 %v210, %v293
    %v307 = vmul.f32 %v213, %v295
    %v308 = vmul.f32 %v218, %v297
    %v309 = vmul.f32 %v221, %v299
    %v310 = vmul.f32 %v226, %v301
    %v311 = vmul.f32 %v229, %v303
    %v312 = vld [vmem:[#allocation11] sm:$0xff]
    %v313 = vld [vmem:[#allocation11 + $0x8] sm:$0xff]
    %v314 = vld [vmem:[#allocation11 + $0x10] sm:$0xff]
    %v315 = vld [vmem:[#allocation11 + $0x18] sm:$0xff]
    %v316 = vld [vmem:[#allocation11 + $0x20] sm:$0xff]
    %v317 = vld [vmem:[#allocation11 + $0x28] sm:$0xff]
    %v318 = vld [vmem:[#allocation11 + $0x30] sm:$0xff]
    %v319 = vld [vmem:[#allocation11 + $0x38] sm:$0xff]
    %v320 = vmul.f32 %v304, %v312
    %v321 = vmul.f32 %v305, %v313
    %v322 = vmul.f32 %v306, %v314
    %v323 = vmul.f32 %v307, %v315
    %v324 = vmul.f32 %v308, %v316
    %v325 = vmul.f32 %v309, %v317
    %v326 = vmul.f32 %v310, %v318
    %v327 = vmul.f32 %v311, %v319
    %v328 = vpack.c.bf16 %v321, %v320
    %v329 = vpack.c.bf16 %v323, %v322
    %v330 = vpack.c.bf16 %v325, %v324
    %v331 = vpack.c.bf16 %v327, %v326
    %v332 = vld [vmem:[#allocation8] sm:$0xf]
    %v333 = vld [vmem:[#allocation8 + $0x4] sm:$0xf]
    %v334 = vld [vmem:[#allocation8 + $0x8] sm:$0xf]
    %v335 = vld [vmem:[#allocation8 + $0xc] sm:$0xf]
    %v336 = vld [vmem:[#allocation8 + $0x10] sm:$0xf]
    %v337 = vld [vmem:[#allocation8 + $0x14] sm:$0xf]
    %v338 = vld [vmem:[#allocation8 + $0x18] sm:$0xf]
    %v339 = vld [vmem:[#allocation8 + $0x1c] sm:$0xf]
    %v340 = vld [vmem:[#allocation8 + $0x20] sm:$0xf]
    %v341 = vld [vmem:[#allocation8 + $0x24] sm:$0xf]
    %v342 = vld [vmem:[#allocation8 + $0x28] sm:$0xf]
    %v343 = vld [vmem:[#allocation8 + $0x2c] sm:$0xf]
    %v344 = vld [vmem:[#allocation8 + $0x30] sm:$0xf]
    %v345 = vld [vmem:[#allocation8 + $0x34] sm:$0xf]
    %v346 = vld [vmem:[#allocation8 + $0x38] sm:$0xf]
    %v347 = vld [vmem:[#allocation8 + $0x3c] sm:$0xf]
    %v348 = vld [vmem:[#allocation10] sm:$0x1]
    %v350 = vlaneseq
    %v351 = vshrl.u32 %v350, 7
    %v352 = vsub.s32 0, %v351
    %v353 = vrot.slane %v348, %v352
    %v371 = vunpack.c.l.b16 %v332
    %v372 = vunpack.c.l.b16 %v333
    %v373 = vunpack.c.l.b16 %v334
    %v374 = vunpack.c.l.b16 %v335
    %v375 = vunpack.c.l.b16 %v336
    %v376 = vunpack.c.l.b16 %v337
    %v377 = vunpack.c.l.b16 %v338
    %v378 = vunpack.c.l.b16 %v339
    %v379 = vunpack.c.l.b16 %v340
    %v380 = vunpack.c.l.b16 %v341
    %v381 = vunpack.c.l.b16 %v342
    %v382 = vunpack.c.l.b16 %v343
    %v383 = vunpack.c.l.b16 %v344
    %v384 = vunpack.c.l.b16 %v345
    %v385 = vunpack.c.l.b16 %v346
    %v386 = vunpack.c.l.b16 %v347
    %v387 = vpack.c.b16 %v372, %v371
    %v388 = vpack.c.b16 %v374, %v373
    %v389 = vpack.c.b16 %v376, %v375
    %v390 = vpack.c.b16 %v378, %v377
    %v391 = vpack.c.b16 %v380, %v379
    %v392 = vpack.c.b16 %v382, %v381
    %v393 = vpack.c.b16 %v384, %v383
    %v394 = vpack.c.b16 %v386, %v385
    %403 = vmatprep.subr.bf16.mxu0 0
    %404 = vmatpush1.bf16.msra.mxu0 %v387
    %405 = vmatprep.subr.bf16.mxu0 0
    %406 = vmatpush1.bf16.msra.mxu0 %v388
    %407 = vmatprep.subr.bf16.mxu0 0
    %408 = vmatpush1.bf16.msra.mxu0 %v389
    %409 = vmatprep.subr.bf16.mxu0 0
    %410 = vmatpush1.bf16.msra.mxu0 %v390
    %411 = vmatprep.subr.bf16.mxu0 0
    %412 = vmatpush1.bf16.msra.mxu0 %v391
    %413 = vmatprep.subr.bf16.mxu0 0
    %414 = vmatpush1.bf16.msra.mxu0 %v392
    %415 = vmatprep.subr.bf16.mxu0 0
    %416 = vmatpush1.bf16.msra.mxu0 %v393
    %417 = vmatprep.subr.bf16.mxu0 0
    %418 = vmatpush1.bf16.msra.mxu0 %v394
    %419 = vmatprep.subr.bf16.mxu0 0
    %420 = vmatpush1.bf16.msra.mxu0 0
    %421 = vmatprep.subr.bf16.mxu0 0
    %422 = vmatpush1.bf16.msra.mxu0 0
    %423 = vmatprep.subr.bf16.mxu0 0
    %424 = vmatpush1.bf16.msra.mxu0 0
    %425 = vmatprep.subr.bf16.mxu0 0
    %426 = vmatpush1.bf16.msra.mxu0 0
    %427 = vmatprep.subr.bf16.mxu0 0
    %428 = vmatpush1.bf16.msra.mxu0 0
    %429 = vmatprep.subr.bf16.mxu0 0
    %430 = vmatpush1.bf16.msra.mxu0 0
    %431 = vmatprep.subr.bf16.mxu0 0
    %432 = vmatpush1.bf16.msra.mxu0 0
    %433 = vmatprep.subr.bf16.mxu0 0
    %434 = vmatpush1.bf16.msra.mxu0 0
    %435 = vmatprep.mubr.bf16.mxu0 0
    %436 = vmatmul.mubr.bf16.gmra.mrb[0].mxu0 %v328
    %v437 = vpop.f32.mrb[0].mxu0
    %v438 = vadd.f32 %v353, %v437
    %v439 = vpop.f32.mrb[0].mxu0
    %v440 = vpop.f32.mrb[0].mxu0
    %v441 = vadd.f32 %v353, %v440
    %v442 = vpop.f32.mrb[0].mxu0
    %443 = vmatprep.mubr.bf16.mxu0 0
    %444 = vmatmul.mubr.bf16.gmra.mrb[0].mxu0 %v329
    %v445 = vpop.f32.mrb[0].mxu0
    %v446 = vadd.f32 %v353, %v445
    %v447 = vpop.f32.mrb[0].mxu0
    %v448 = vpop.f32.mrb[0].mxu0
    %v449 = vadd.f32 %v353, %v448
    %v450 = vpop.f32.mrb[0].mxu0
    %451 = vmatprep.mubr.bf16.mxu0 0
    %452 = vmatmul.mubr.bf16.gmra.mrb[0].mxu0 %v330
    %v453 = vpop.f32.mrb[0].mxu0
    %v454 = vadd.f32 %v353, %v453
    %v455 = vpop.f32.mrb[0].mxu0
    %v456 = vpop.f32.mrb[0].mxu0
    %v457 = vadd.f32 %v353, %v456
    %v458 = vpop.f32.mrb[0].mxu0
    %459 = vmatprep.mubr.bf16.mxu0 0
    %460 = vmatmul.mubr.bf16.gmra.mrb[0].mxu0 %v331
    %v461 = vpop.f32.mrb[0].mxu0
    %v462 = vadd.f32 %v353, %v461
    %v463 = vpop.f32.mrb[0].mxu0
    %v464 = vpop.f32.mrb[0].mxu0
    %v465 = vadd.f32 %v353, %v464
    %v466 = vpop.f32.mrb[0].mxu0
    %467 = vdwg.mxu0
    %v468 = vmin.f32 %v438, 20.0
    %v469 = vmin.f32 %v441, 20.0
    %v470 = vmin.f32 %v446, 20.0
    %v471 = vmin.f32 %v449, 20.0
    %v472 = vmin.f32 %v454, 20.0
    %v473 = vmin.f32 %v457, 20.0
    %v474 = vmin.f32 %v462, 20.0
    %v475 = vmin.f32 %v465, 20.0
    %v476 = vmul.f32 %v468, 1.442695
    %v477 = vpow.pop %v476
    %v478 = vmul.f32 %v469, 1.442695
    %v479 = vpow.pop %v478
    %v480 = vmul.f32 %v470, 1.442695
    %v481 = vpow.pop %v480
    %v482 = vmul.f32 %v471, 1.442695
    %v483 = vpow.pop %v482
    %v484 = vmul.f32 %v472, 1.442695
    %v485 = vpow.pop %v484
    %v486 = vmul.f32 %v473, 1.442695
    %v487 = vpow.pop %v486
    %v488 = vmul.f32 %v474, 1.442695
    %v489 = vpow.pop %v488
    %v490 = vmul.f32 %v475, 1.442695
    %v491 = vpow.pop %v490
    %v492 = vadd.f32 %v477, 1.0
    %v493 = vadd.f32 %v479, 1.0
    %v494 = vadd.f32 %v481, 1.0
    %v495 = vadd.f32 %v483, 1.0
    %v496 = vadd.f32 %v485, 1.0
    %v497 = vadd.f32 %v487, 1.0
    %v498 = vadd.f32 %v489, 1.0
    %v499 = vadd.f32 %v491, 1.0
    %v500 = vmul.f32 %v492, %v492
    %v501 = vmul.f32 %v493, %v493
    %v502 = vmul.f32 %v494, %v494
    %v503 = vmul.f32 %v495, %v495
    %v504 = vmul.f32 %v496, %v496
    %v505 = vmul.f32 %v497, %v497
    %v506 = vmul.f32 %v498, %v498
    %v507 = vmul.f32 %v499, %v499
    %v508 = vsub.f32 %v500, 1.0
    %v509 = vsub.f32 %v501, 1.0
    %v510 = vsub.f32 %v502, 1.0
    %v511 = vsub.f32 %v503, 1.0
    %v512 = vsub.f32 %v504, 1.0
    %v513 = vsub.f32 %v505, 1.0
    %v514 = vsub.f32 %v506, 1.0
    %v515 = vsub.f32 %v507, 1.0
    %v516 = vadd.f32 %v500, 1.0
    %v517 = vadd.f32 %v501, 1.0
    %v518 = vadd.f32 %v502, 1.0
    %v519 = vadd.f32 %v503, 1.0
    %v520 = vadd.f32 %v504, 1.0
    %v521 = vadd.f32 %v505, 1.0
    %v522 = vadd.f32 %v506, 1.0
    %v523 = vadd.f32 %v507, 1.0
    %v524 = vrcp.pop %v516
    %v525 = vmul.f32 %v508, %v524
    %v526 = vrcp.pop %v517
    %v527 = vmul.f32 %v509, %v526
    %v528 = vrcp.pop %v518
    %v529 = vmul.f32 %v510, %v528
    %v530 = vrcp.pop %v519
    %v531 = vmul.f32 %v511, %v530
    %v532 = vrcp.pop %v520
    %v533 = vmul.f32 %v512, %v532
    %v534 = vrcp.pop %v521
    %v535 = vmul.f32 %v513, %v534
    %v536 = vrcp.pop %v522
    %v537 = vmul.f32 %v514, %v536
    %v538 = vrcp.pop %v523
    %v539 = vmul.f32 %v515, %v538
    %v540 = vmul.f32 %v438, %v525
    %v541 = vmul.f32 %v441, %v527
    %v542 = vmul.f32 %v446, %v529
    %v543 = vmul.f32 %v449, %v531
    %v544 = vmul.f32 %v454, %v533
    %v545 = vmul.f32 %v457, %v535
    %v546 = vmul.f32 %v462, %v537
    %v547 = vmul.f32 %v465, %v539
    %v548 = vrot.slane %v540, 4
    %v549 = vmax.f32 %v540, %v548
    %v550 = vrot.slane %v549, 2
    %v551 = vmax.f32 %v549, %v550
    %v552 = vrot.slane %v551, 1
    %v553 = vmax.f32 %v551, %v552
    %v554 = vrot.slane %v541, 4
    %v555 = vmax.f32 %v541, %v554
    %v556 = vrot.slane %v555, 2
    %v557 = vmax.f32 %v555, %v556
    %v558 = vrot.slane %v557, 1
    %v559 = vmax.f32 %v557, %v558
    %v560 = vrot.slane %v542, 4
    %v561 = vmax.f32 %v542, %v560
    %v562 = vrot.slane %v561, 2
    %v563 = vmax.f32 %v561, %v562
    %v564 = vrot.slane %v563, 1
    %v565 = vmax.f32 %v563, %v564
    %v566 = vrot.slane %v543, 4
    %v567 = vmax.f32 %v543, %v566
    %v568 = vrot.slane %v567, 2
    %v569 = vmax.f32 %v567, %v568
    %v570 = vrot.slane %v569, 1
    %v571 = vmax.f32 %v569, %v570
    %v572 = vrot.slane %v544, 4
    %v573 = vmax.f32 %v544, %v572
    %v574 = vrot.slane %v573, 2
    %v575 = vmax.f32 %v573, %v574
    %v576 = vrot.slane %v575, 1
    %v577 = vmax.f32 %v575, %v576
    %v578 = vrot.slane %v545, 4
    %v579 = vmax.f32 %v545, %v578
    %v580 = vrot.slane %v579, 2
    %v581 = vmax.f32 %v579, %v580
    %v582 = vrot.slane %v581, 1
    %v583 = vmax.f32 %v581, %v582
    %v584 = vrot.slane %v546, 4
    %v585 = vmax.f32 %v546, %v584
    %v586 = vrot.slane %v585, 2
    %v587 = vmax.f32 %v585, %v586
    %v588 = vrot.slane %v587, 1
    %v589 = vmax.f32 %v587, %v588
    %v590 = vrot.slane %v547, 4
    %v591 = vmax.f32 %v547, %v590
    %v592 = vrot.slane %v591, 2
    %v593 = vmax.f32 %v591, %v592
    %v594 = vrot.slane %v593, 1
    %v595 = vmax.f32 %v593, %v594
    %vm604 = vcmask 1041409
    %v605 = vsel %vm604, %v559, %v553
    %vm606 = vcmask 1042434
    %v607 = vsel %vm606, %v565, %v605
    %vm608 = vcmask 1043459
    %v609 = vsel %vm608, %v571, %v607
    %vm610 = vcmask 1044484
    %v611 = vsel %vm610, %v577, %v609
    %vm612 = vcmask 1045509
    %v613 = vsel %vm612, %v583, %v611
    %vm614 = vcmask 1046534
    %v615 = vsel %vm614, %v589, %v613
    %vm616 = vcmask 1047559
    %v617 = vsel %vm616, %v595, %v615
    %619 = vst [vmem:[#allocation13] sm:$0xff] %v617
    // Predicated region
    $region50: #{tpu_custom_call.1} parent=1 // pred_check
      _
    $region51: #{tpu_custom_call.1} parent=1 // pred_check_branch
      %621 = sbr.rel (0) target = $region53
    $region52: #{tpu_custom_call.1} parent=1 // pred_region
      %s623 = ssub.s32 128, 128
      %624 = vsyncadd [#allocation4], %s623
      %s626 = sshll.u32 [#allocation13], 4
      %s627 = int_to_ptr.vmem [resolvable:$true] %s626
      %629 = dma.vmem_to_hbm [thread:$0]  %s627, 128, %s6, [#allocation4]
    $region53: #{tpu_custom_call.1} parent=1 // pred_fallthru
      _
    // Predicated region
    $region54: #{tpu_custom_call.1} parent=1 // pred_check
      _
    $region55: #{tpu_custom_call.1} parent=1 // pred_check_branch
      %631 = sbr.rel (0) target = $region57
    $region56: #{tpu_custom_call.1} parent=1 // pred_region
      %632 = dma.done [#allocation4], 128
    $region57: #{tpu_custom_call.1} parent=1 // pred_fallthru
      _
    %633 = vsyncpa [#allocation3], 1
    %634 = vsyncpa [#allocation6], 1
    %635 = vsyncpa [#allocation9], 1
    %636 = vsyncpa [#allocation12], 1
    %637 = vsyncpa [#allocation4], 1

</llo_original>
